<compile_context>
chip_gen: v6e
topology: v6e:2x2x1
jax: 0.10.0
libtpu: 0.0.40
codegen_flags: <defaults>
</compile_context>

<pallas_src>
import jax
import jax.numpy as jnp
from jax import lax
from jax.experimental import pallas as pl
from jax.experimental.pallas import tpu as pltpu

NUM_STATE = 2          # MountainCar-v0 observation dim
HIDDEN = 128
SUB_B = 256            # lanes processed per inner-loop step (stays in vregs)
DEFAULT_TILE_B = 8192  # batch lanes per grid step


def _round_up(n, m):
    return ((n + m - 1) // m) * m


def critic_kernel(xt_ref, w_ref, b2_ref, out_ref):
    # xt : (NUM_STATE, TILE_B)   batch along lanes (dense loads)
    # w  : (HIDDEN, NUM_STATE+2) cols [0:NUM_STATE]=fc1.weight,
    #                            col NUM_STATE = fc1.bias,
    #                            col NUM_STATE+1 = state_value.weight
    # b2 : (1, 1) scalar in SMEM
    # out: (1, TILE_B)           batch along lanes (dense stores)
    w = w_ref[...]
    b1 = w[:, NUM_STATE:NUM_STATE + 1]        # (HIDDEN, 1)
    w2 = w[:, NUM_STATE + 1:NUM_STATE + 2]    # (HIDDEN, 1)
    b2 = b2_ref[0, 0]

    tile_b = out_ref.shape[1]
    n_sub = tile_b // SUB_B                   # static

    def body(i, carry):
        c = pl.multiple_of(i * SUB_B, SUB_B)
        # Layer 1: K=2 -> two VPU broadcast-FMAs over the batch lanes.
        h = b1
        for k in range(NUM_STATE):            # static, NUM_STATE == 2
            h = h + w[:, k:k + 1] * xt_ref[k:k + 1, pl.ds(c, SUB_B)]
        h = jnp.maximum(h, 0.0)                # ReLU, (HIDDEN, SUB_B)
        # Layer 2: N=1 -> VPU multiply + sublane reduction.
        v = jnp.sum(h * w2, axis=0, keepdims=True) + b2   # (1, SUB_B)
        out_ref[0:1, pl.ds(c, SUB_B)] = v.astype(out_ref.dtype)
        return carry

    lax.fori_loop(0, n_sub, body, 0, unroll=True)


def _critic_forward_impl(x, w1, b1, w2, b2, *, tile_b=DEFAULT_TILE_B):
    """x: (B, NUM_STATE) f32 -> (B, 1) f32 critic values."""
    B = x.shape[0]

    # Grid / tile choice: big tiles amortize per-step pipeline overhead, but
    # keep >= 2 grid steps (when the batch allows) so the "parallel" grid axis
    # can shard across v7x's 2 TensorCores. Tiles are multiples of SUB_B so
    # the in-kernel sub-column loop divides evenly.
    num_tiles = max(1, -(-B // tile_b))
    if B > SUB_B:
        num_tiles = max(num_tiles, 2)
    tb = _round_up(max(1, -(-B // num_tiles)), SUB_B)
    b_pad = tb * num_tiles

    # Lane-dense orientation: batch along lanes for both input and output.
    # (Runs inside the same jit as the pallas_call, so XLA fuses the pad /
    # transpose with the surrounding program instead of an extra HBM pass.)
    xt = jnp.pad(x, ((0, b_pad - B), (0, 0))).T            # (NUM_STATE, b_pad)

    # Merge the three tiny weight operands into one resident DMA stream.
    w_merged = jnp.concatenate([w1, b1, w2], axis=1)       # (HIDDEN, 4)
    b2s = jnp.reshape(b2, (1, 1)).astype(jnp.float32)

    # Per-step VMEM footprint (double-buffered xt/out + resident weights +
    # in-kernel sub-column intermediates) is ~2.5 MiB at tb=8192 — well under
    # v5e's 16 MiB scoped default. Only request more for unusually large tiles.
    vmem_est = (2 * 2 * (8 * tb * 4)            # xt + out, double-buffered
                + 2 * HIDDEN * 128 * 4          # merged weights (lane-padded)
                + 6 * HIDDEN * SUB_B * 4)       # sub-column intermediates
    cp_kwargs = dict(dimension_semantics=("parallel",))
    if vmem_est > 12 * 1024 * 1024:
        cp_kwargs["vmem_limit_bytes"] = min(2 * vmem_est, 64 * 1024 * 1024)

    out = pl.pallas_call(
        critic_kernel,
        out_shape=jax.ShapeDtypeStruct((1, b_pad), jnp.float32),
        grid=(num_tiles,),
        in_specs=[
            pl.BlockSpec((NUM_STATE, tb), lambda i: (0, i)),           # x tile
            pl.BlockSpec((HIDDEN, NUM_STATE + 2), lambda i: (0, 0)),   # weights
            pl.BlockSpec(memory_space=pltpu.MemorySpace.SMEM),         # b2
        ],
        out_specs=pl.BlockSpec((1, tb), lambda i: (0, i)),
        compiler_params=pltpu.CompilerParams(**cp_kwargs),
    )(xt, w_merged, b2s)

    return out[0, :B].reshape(B, 1)


critic_forward = jax.jit(_critic_forward_impl, static_argnames=("tile_b",))


def init_params(key):
    # PyTorch default init: U(-1/sqrt(fan_in), 1/sqrt(fan_in)).
    k1, k2, k3, k4 = jax.random.split(key, 4)
    bound1 = 1.0 / jnp.sqrt(NUM_STATE)
    bound2 = 1.0 / jnp.sqrt(HIDDEN)
    w1 = jax.random.uniform(k1, (HIDDEN, NUM_STATE), jnp.float32, -bound1, bound1)
    b1 = jax.random.uniform(k2, (HIDDEN, 1), jnp.float32, -bound1, bound1)
    w2 = jax.random.uniform(k3, (HIDDEN, 1), jnp.float32, -bound2, bound2)
    b2 = jax.random.uniform(k4, (1, 1), jnp.float32, -bound2, bound2)
    return w1, b1, w2, b2


def reference_forward(x, w1, b1, w2, b2):
    h = jnp.maximum(x @ w1.T + b1.T, 0.0)   # (B, HIDDEN)
    return h @ w2 + b2                      # (B, 1)


if __name__ == "__main__":
    key = jax.random.PRNGKey(0)
    kx, kp, kx2 = jax.random.split(key, 3)

    w1, b1, w2, b2 = init_params(kp)

    # Small, module-consistent shape: batch=8 observations of dim 2.
    x = jax.random.normal(kx, (8, NUM_STATE), jnp.float32)
    value = critic_forward(x, w1, b1, w2, b2)
    jax.block_until_ready(value)
    expected = reference_forward(x, w1, b1, w2, b2)
    assert value.shape == (8, 1)
    assert jnp.allclose(value, expected, atol=1e-4, rtol=1e-4)

    # Multi-tile path: 2 grid steps, exercises the sub-column loop + padding.
    x2 = jax.random.normal(kx2, (600, NUM_STATE), jnp.float32)
    value2 = critic_forward(x2, w1, b1, w2, b2)
    jax.block_until_ready(value2)
    expected2 = reference_forward(x2, w1, b1, w2, b2)
    assert value2.shape == (600, 1)
    assert jnp.allclose(value2, expected2, atol=1e-4, rtol=1e-4)

    print("KERNEL_OK")
</pallas_src>

<mosaic_0001>
module attributes {stable_mosaic.version = 11 : i64} {
  func.func @critic_kernel(%arg0: i32, %arg1: memref<2x256xf32, #tpu.memory_space<vmem>>, %arg2: memref<128x4xf32, #tpu.memory_space<vmem>>, %arg3: memref<1x1xf32, #tpu.memory_space<smem>>, %arg4: memref<1x256xf32, #tpu.memory_space<vmem>>) attributes {dimension_semantics = [#tpu.dimension_semantics<parallel>], iteration_bounds = array<i64: 1>, scalar_prefetch = 0 : i64, scratch_operands = 0 : i64, tpu.core_type = #tpu.core_type<tc>, window_params = [{transform_indices = @transform_0, window_bounds = array<i64: 2, 256>}, {pipeline_mode = #tpu.pipeline_mode<synchronous>, transform_indices = @transform_1, window_bounds = array<i64: 128, 4>}, {transform_indices = @transform_2, window_bounds = array<i64: 1, 1>}, {transform_indices = @transform_3, window_bounds = array<i64: 1, 256>}]} {
    %c0 = arith.constant 0 : index
    %c0_0 = arith.constant 0 : index
    %0 = vector.load %arg2[%c0, %c0_0] : memref<128x4xf32, #tpu.memory_space<vmem>>, vector<128x4xf32>
    %1 = vector.extract_strided_slice %0 {offsets = [0, 2], sizes = [128, 1], strides = [1, 1]} : vector<128x4xf32> to vector<128x1xf32>
    %2 = vector.extract_strided_slice %0 {offsets = [0, 3], sizes = [128, 1], strides = [1, 1]} : vector<128x4xf32> to vector<128x1xf32>
    %c0_1 = arith.constant 0 : index
    %c0_2 = arith.constant 0 : index
    %3 = memref.load %arg3[%c0_1, %c0_2] : memref<1x1xf32, #tpu.memory_space<smem>>
    %c0_i32 = arith.constant 0 : i32
    %c256_i32 = arith.constant 256 : i32
    %4 = arith.muli %c0_i32, %c256_i32 : i32
    %5 = tpu.assume_multiple %4, 256 : i32
    %6 = vector.extract_strided_slice %0 {offsets = [0, 0], sizes = [128, 1], strides = [1, 1]} : vector<128x4xf32> to vector<128x1xf32>
    %c0_3 = arith.constant 0 : index
    %7 = arith.index_cast %5 : i32 to index
    %8 = vector.load %arg1[%c0_3, %7] : memref<2x256xf32, #tpu.memory_space<vmem>>, vector<1x256xf32>
    %9 = vector.broadcast %6 : vector<128x1xf32> to vector<128x256xf32>
    %10 = vector.broadcast %8 : vector<1x256xf32> to vector<128x256xf32>
    %11 = arith.mulf %9, %10 : vector<128x256xf32>
    %12 = vector.broadcast %1 : vector<128x1xf32> to vector<128x256xf32>
    %13 = arith.addf %12, %11 : vector<128x256xf32>
    %14 = vector.extract_strided_slice %0 {offsets = [0, 1], sizes = [128, 1], strides = [1, 1]} : vector<128x4xf32> to vector<128x1xf32>
    %c1 = arith.constant 1 : index
    %15 = arith.index_cast %5 : i32 to index
    %16 = vector.load %arg1[%c1, %15] : memref<2x256xf32, #tpu.memory_space<vmem>>, vector<1x256xf32>
    %17 = vector.broadcast %14 : vector<128x1xf32> to vector<128x256xf32>
    %18 = vector.broadcast %16 : vector<1x256xf32> to vector<128x256xf32>
    %19 = arith.mulf %17, %18 : vector<128x256xf32>
    %20 = arith.addf %13, %19 : vector<128x256xf32>
    %cst = arith.constant 0.000000e+00 : f32
    %21 = vector.broadcast %cst : f32 to vector<128x256xf32>
    %22 = arith.maximumf %20, %21 : vector<128x256xf32>
    %23 = vector.broadcast %2 : vector<128x1xf32> to vector<128x256xf32>
    %24 = arith.mulf %22, %23 : vector<128x256xf32>
    %cst_4 = arith.constant dense<0.000000e+00> : vector<256xf32>
    %25 = vector.multi_reduction <add>, %24, %cst_4 [0] : vector<128x256xf32> to vector<256xf32>
    %26 = vector.shape_cast %25 : vector<256xf32> to vector<1x256xf32>
    %27 = vector.broadcast %3 : f32 to vector<1x256xf32>
    %28 = arith.addf %26, %27 : vector<1x256xf32>
    %c0_5 = arith.constant 0 : index
    %29 = arith.index_cast %5 : i32 to index
    %30 = vector.load %arg4[%c0_5, %29] : memref<1x256xf32, #tpu.memory_space<vmem>>, vector<1x256xf32>
    tpu.vector_store %arg4[%c0_5, %29], %28 {strides = array<i32>} : memref<1x256xf32, #tpu.memory_space<vmem>>, vector<1x256xf32>,
    %c1_i32 = arith.constant 1 : i32
    return
  }
  func.func @transform_0(%arg0: i32) -> (i32, i32) {
    %c0_i32 = arith.constant 0 : i32
    %c0_i32_0 = arith.constant 0 : i32
    return %c0_i32, %arg0 : i32, i32
  }
  func.func @transform_1(%arg0: i32) -> (i32, i32) {
    %c0_i32 = arith.constant 0 : i32
    %c0_i32_0 = arith.constant 0 : i32
    %c0_i32_1 = arith.constant 0 : i32
    return %c0_i32, %c0_i32_0 : i32, i32
  }
  func.func @transform_2(%arg0: i32) -> (i32, i32) {
    %c0_i32 = arith.constant 0 : i32
    %c0_i32_0 = arith.constant 0 : i32
    %c0_i32_1 = arith.constant 0 : i32
    return %c0_i32, %c0_i32_0 : i32, i32
  }
  func.func @transform_3(%arg0: i32) -> (i32, i32) {
    %c0_i32 = arith.constant 0 : i32
    %c0_i32_0 = arith.constant 0 : i32
    return %c0_i32, %arg0 : i32, i32
  }
}

</mosaic_0001>

<llo_original>
// kernel: _critic_forward_impl.1
$region0: #{_critic_forward_impl.1}
  #allocation0 [shape = 'u32[]', space=smem, size = 0x4, offset = 0x4, fixed_abs, tag = 'smem constant byte address 0x4 - core index']
  #allocation1 [shape = 'u32[144,128]{1,0:T(1,128)}', space=vmem, size = 0x12000, scoped, tag = 'internal scratch']
  #allocation2 [shape = 'f32[1,1]{1,0:T(1,128)S(6)}', space=smem, size = 0x200, scoped, tag = 'scoped memory for _critic_forward_impl.1']
  %s0 = inlined_call_operand.vmem [shape: f32[2,256], index: 0, kind: input, shape index: {}]
  %s1 = inlined_call_operand.vmem [shape: f32[128,4], index: 1, kind: input, shape index: {}]
  %s2 = inlined_call_operand.<no memory space> [shape: f32[1,1], index: 2, kind: input, shape index: {}]
  %s3 = inlined_call_operand.vmem [shape: f32[1,256], index: 3, kind: output, shape index: {}]
  %s4 = sld [smem:[#allocation0]]
  $region22: #{_critic_forward_impl.1} parent=0
    _
  %s6 = ssub.s32 1, %s4
  %s7 = scalar_select 0, %s6, %s4
  %8 = sst [smem:[#allocation2]] %s2
  // Predicated region
  $region2: #{_critic_forward_impl.1} parent=0 // pred_check
    _
  $region3: #{_critic_forward_impl.1} parent=0 // pred_check_branch
    %10 = sbr.rel (0) target = $region5
  $region4: #{_critic_forward_impl.1} parent=0 // pred_region
    _
  $region5: #{_critic_forward_impl.1} parent=0 // pred_fallthru
    _
  // Predicated region
  $region6: #{_critic_forward_impl.1} parent=0 // pred_check
    _
  $region7: #{_critic_forward_impl.1} parent=0 // pred_check_branch
    %12 = sbr.rel (0) target = $region9
  $region8: #{_critic_forward_impl.1} parent=0 // pred_region
    _
  $region9: #{_critic_forward_impl.1} parent=0 // pred_fallthru
    _
  // Predicated region
  $region10: #{_critic_forward_impl.1} parent=0 // pred_check
    _
  $region11: #{_critic_forward_impl.1} parent=0 // pred_check_branch
    %14 = sbr.rel (0) target = $region13
  $region12: #{_critic_forward_impl.1} parent=0 // pred_region
    _
  $region13: #{_critic_forward_impl.1} parent=0 // pred_fallthru
    _
  %v15 = vld [vmem:[%s1] sm:$0xff]
  %v16 = vld [vmem:[%s1 + $0x8] sm:$0xff]
  %v17 = vld [vmem:[%s1 + $0x10] sm:$0xff]
  %v18 = vld [vmem:[%s1 + $0x18] sm:$0xff]
  %v19 = vld [vmem:[%s1 + $0x20] sm:$0xff]
  %v20 = vld [vmem:[%s1 + $0x28] sm:$0xff]
  %v21 = vld [vmem:[%s1 + $0x30] sm:$0xff]
  %v22 = vld [vmem:[%s1 + $0x38] sm:$0xff]
  %v23 = vld [vmem:[%s1 + $0x40] sm:$0xff]
  %v24 = vld [vmem:[%s1 + $0x48] sm:$0xff]
  %v25 = vld [vmem:[%s1 + $0x50] sm:$0xff]
  %v26 = vld [vmem:[%s1 + $0x58] sm:$0xff]
  %v27 = vld [vmem:[%s1 + $0x60] sm:$0xff]
  %v28 = vld [vmem:[%s1 + $0x68] sm:$0xff]
  %v29 = vld [vmem:[%s1 + $0x70] sm:$0xff]
  %v30 = vld [vmem:[%s1 + $0x78] sm:$0xff]
  %s31 = sld [smem:[#allocation2]]
  %v32 = vld [vmem:[%s0] ss:$2 sm:$0x3]
  %34 = vset.pattern.permute.xlu0 0
  %35 = vperm.xlu0 %34, %v15
  %v36 = vpop.permute.xlu0 %35
  %39 = vset.pattern.permute.xlu0 0
  %40 = vperm.xlu0 %39, %v16
  %v41 = vpop.permute.xlu0 %40
  %44 = vset.pattern.permute.xlu0 0
  %45 = vperm.xlu0 %44, %v17
  %v46 = vpop.permute.xlu0 %45
  %49 = vset.pattern.permute.xlu0 0
  %50 = vperm.xlu0 %49, %v18
  %v51 = vpop.permute.xlu0 %50
  %54 = vset.pattern.permute.xlu0 0
  %55 = vperm.xlu0 %54, %v19
  %v56 = vpop.permute.xlu0 %55
  %59 = vset.pattern.permute.xlu0 0
  %60 = vperm.xlu0 %59, %v20
  %v61 = vpop.permute.xlu0 %60
  %64 = vset.pattern.permute.xlu0 0
  %65 = vperm.xlu0 %64, %v21
  %v66 = vpop.permute.xlu0 %65
  %69 = vset.pattern.permute.xlu0 0
  %70 = vperm.xlu0 %69, %v22
  %v71 = vpop.permute.xlu0 %70
  %74 = vset.pattern.permute.xlu0 0
  %75 = vperm.xlu0 %74, %v23
  %v76 = vpop.permute.xlu0 %75
  %79 = vset.pattern.permute.xlu0 0
  %80 = vperm.xlu0 %79, %v24
  %v81 = vpop.permute.xlu0 %80
  %84 = vset.pattern.permute.xlu0 0
  %85 = vperm.xlu0 %84, %v25
  %v86 = vpop.permute.xlu0 %85
  %89 = vset.pattern.permute.xlu0 0
  %90 = vperm.xlu0 %89, %v26
  %v91 = vpop.permute.xlu0 %90
  %94 = vset.pattern.permute.xlu0 0
  %95 = vperm.xlu0 %94, %v27
  %v96 = vpop.permute.xlu0 %95
  %99 = vset.pattern.permute.xlu0 0
  %100 = vperm.xlu0 %99, %v28
  %v101 = vpop.permute.xlu0 %100
  %104 = vset.pattern.permute.xlu0 0
  %105 = vperm.xlu0 %104, %v29
  %v106 = vpop.permute.xlu0 %105
  %109 = vset.pattern.permute.xlu0 0
  %110 = vperm.xlu0 %109, %v30
  %v111 = vpop.permute.xlu0 %110
  %v114 = vlaneseq
  %v115 = vshrl.u32 %v114, 7
  %v116 = vsub.s32 0, %v115
  %v117 = vrot.slane %v32, %v116
  %v118 = vlaneseq
  %v119 = vshrl.u32 %v118, 7
  %v120 = vsub.s32 1, %v119
  %v121 = vrot.slane %v32, %v120
  %v124 = vmul.f32 %v36, %v117
  %v125 = vmul.f32 %v36, %v121
  %v126 = vmul.f32 %v41, %v117
  %v127 = vmul.f32 %v41, %v121
  %v128 = vmul.f32 %v46, %v117
  %v129 = vmul.f32 %v46, %v121
  %v130 = vmul.f32 %v51, %v117
  %v131 = vmul.f32 %v51, %v121
  %v132 = vmul.f32 %v56, %v117
  %v133 = vmul.f32 %v56, %v121
  %v134 = vmul.f32 %v61, %v117
  %v135 = vmul.f32 %v61, %v121
  %v136 = vmul.f32 %v66, %v117
  %v137 = vmul.f32 %v66, %v121
  %v138 = vmul.f32 %v71, %v117
  %v139 = vmul.f32 %v71, %v121
  %v140 = vmul.f32 %v76, %v117
  %v141 = vmul.f32 %v76, %v121
  %v142 = vmul.f32 %v81, %v117
  %v143 = vmul.f32 %v81, %v121
  %v144 = vmul.f32 %v86, %v117
  %v145 = vmul.f32 %v86, %v121
  %v146 = vmul.f32 %v91, %v117
  %v147 = vmul.f32 %v91, %v121
  %v148 = vmul.f32 %v96, %v117
  %v149 = vmul.f32 %v96, %v121
  %v150 = vmul.f32 %v101, %v117
  %v151 = vmul.f32 %v101, %v121
  %v152 = vmul.f32 %v106, %v117
  %v153 = vmul.f32 %v106, %v121
  %v154 = vmul.f32 %v111, %v117
  %v155 = vmul.f32 %v111, %v121
  %156 = vset.pattern.permute.xlu0 2
  %157 = vperm.xlu0 %156, %v15
  %v158 = vpop.permute.xlu0 %157
  %160 = vset.pattern.permute.xlu0 2
  %161 = vperm.xlu0 %160, %v16
  %v162 = vpop.permute.xlu0 %161
  %164 = vset.pattern.permute.xlu0 2
  %165 = vperm.xlu0 %164, %v17
  %v166 = vpop.permute.xlu0 %165
  %168 = vset.pattern.permute.xlu0 2
  %169 = vperm.xlu0 %168, %v18
  %v170 = vpop.permute.xlu0 %169
  %172 = vset.pattern.permute.xlu0 2
  %173 = vperm.xlu0 %172, %v19
  %v174 = vpop.permute.xlu0 %173
  %176 = vset.pattern.permute.xlu0 2
  %177 = vperm.xlu0 %176, %v20
  %v178 = vpop.permute.xlu0 %177
  %180 = vset.pattern.permute.xlu0 2
  %181 = vperm.xlu0 %180, %v21
  %v182 = vpop.permute.xlu0 %181
  %184 = vset.pattern.permute.xlu0 2
  %185 = vperm.xlu0 %184, %v22
  %v186 = vpop.permute.xlu0 %185
  %188 = vset.pattern.permute.xlu0 2
  %189 = vperm.xlu0 %188, %v23
  %v190 = vpop.permute.xlu0 %189
  %192 = vset.pattern.permute.xlu0 2
  %193 = vperm.xlu0 %192, %v24
  %v194 = vpop.permute.xlu0 %193
  %196 = vset.pattern.permute.xlu0 2
  %197 = vperm.xlu0 %196, %v25
  %v198 = vpop.permute.xlu0 %197
  %200 = vset.pattern.permute.xlu0 2
  %201 = vperm.xlu0 %200, %v26
  %v202 = vpop.permute.xlu0 %201
  %204 = vset.pattern.permute.xlu0 2
  %205 = vperm.xlu0 %204, %v27
  %v206 = vpop.permute.xlu0 %205
  %208 = vset.pattern.permute.xlu0 2
  %209 = vperm.xlu0 %208, %v28
  %v210 = vpop.permute.xlu0 %209
  %212 = vset.pattern.permute.xlu0 2
  %213 = vperm.xlu0 %212, %v29
  %v214 = vpop.permute.xlu0 %213
  %216 = vset.pattern.permute.xlu0 2
  %217 = vperm.xlu0 %216, %v30
  %v218 = vpop.permute.xlu0 %217
  %v220 = vadd.f32 %v158, %v124
  %v221 = vadd.f32 %v158, %v125
  %v222 = vadd.f32 %v162, %v126
  %v223 = vadd.f32 %v162, %v127
  %v224 = vadd.f32 %v166, %v128
  %v225 = vadd.f32 %v166, %v129
  %v226 = vadd.f32 %v170, %v130
  %v227 = vadd.f32 %v170, %v131
  %v228 = vadd.f32 %v174, %v132
  %v229 = vadd.f32 %v174, %v133
  %v230 = vadd.f32 %v178, %v134
  %v231 = vadd.f32 %v178, %v135
  %v232 = vadd.f32 %v182, %v136
  %v233 = vadd.f32 %v182, %v137
  %v234 = vadd.f32 %v186, %v138
  %v235 = vadd.f32 %v186, %v139
  %v236 = vadd.f32 %v190, %v140
  %v237 = vadd.f32 %v190, %v141
  %v238 = vadd.f32 %v194, %v142
  %v239 = vadd.f32 %v194, %v143
  %v240 = vadd.f32 %v198, %v144
  %v241 = vadd.f32 %v198, %v145
  %v242 = vadd.f32 %v202, %v146
  %v243 = vadd.f32 %v202, %v147
  %v244 = vadd.f32 %v206, %v148
  %v245 = vadd.f32 %v206, %v149
  %v246 = vadd.f32 %v210, %v150
  %v247 = vadd.f32 %v210, %v151
  %v248 = vadd.f32 %v214, %v152
  %v249 = vadd.f32 %v214, %v153
  %v250 = vadd.f32 %v218, %v154
  %v251 = vadd.f32 %v218, %v155
  %s252 = scalar_lea.vmem %s0, 1
  %v253 = vld [vmem:[%s252] ss:$2 sm:$0x3]
  %254 = vset.pattern.permute.xlu0 1
  %255 = vperm.xlu0 %254, %v15
  %v256 = vpop.permute.xlu0 %255
  %258 = vset.pattern.permute.xlu0 1
  %259 = vperm.xlu0 %258, %v16
  %v260 = vpop.permute.xlu0 %259
  %262 = vset.pattern.permute.xlu0 1
  %263 = vperm.xlu0 %262, %v17
  %v264 = vpop.permute.xlu0 %263
  %266 = vset.pattern.permute.xlu0 1
  %267 = vperm.xlu0 %266, %v18
  %v268 = vpop.permute.xlu0 %267
  %270 = vset.pattern.permute.xlu0 1
  %271 = vperm.xlu0 %270, %v19
  %v272 = vpop.permute.xlu0 %271
  %274 = vset.pattern.permute.xlu0 1
  %275 = vperm.xlu0 %274, %v20
  %v276 = vpop.permute.xlu0 %275
  %278 = vset.pattern.permute.xlu0 1
  %279 = vperm.xlu0 %278, %v21
  %v280 = vpop.permute.xlu0 %279
  %282 = vset.pattern.permute.xlu0 1
  %283 = vperm.xlu0 %282, %v22
  %v284 = vpop.permute.xlu0 %283
  %286 = vset.pattern.permute.xlu0 1
  %287 = vperm.xlu0 %286, %v23
  %v288 = vpop.permute.xlu0 %287
  %290 = vset.pattern.permute.xlu0 1
  %291 = vperm.xlu0 %290, %v24
  %v292 = vpop.permute.xlu0 %291
  %294 = vset.pattern.permute.xlu0 1
  %295 = vperm.xlu0 %294, %v25
  %v296 = vpop.permute.xlu0 %295
  %298 = vset.pattern.permute.xlu0 1
  %299 = vperm.xlu0 %298, %v26
  %v300 = vpop.permute.xlu0 %299
  %302 = vset.pattern.permute.xlu0 1
  %303 = vperm.xlu0 %302, %v27
  %v304 = vpop.permute.xlu0 %303
  %306 = vset.pattern.permute.xlu0 1
  %307 = vperm.xlu0 %306, %v28
  %v308 = vpop.permute.xlu0 %307
  %310 = vset.pattern.permute.xlu0 1
  %311 = vperm.xlu0 %310, %v29
  %v312 = vpop.permute.xlu0 %311
  %314 = vset.pattern.permute.xlu0 1
  %315 = vperm.xlu0 %314, %v30
  %v316 = vpop.permute.xlu0 %315
  %v319 = vlaneseq
  %v320 = vshrl.u32 %v319, 7
  %v321 = vsub.s32 0, %v320
  %v322 = vrot.slane %v253, %v321
  %v323 = vlaneseq
  %v324 = vshrl.u32 %v323, 7
  %v325 = vsub.s32 1, %v324
  %v326 = vrot.slane %v253, %v325
  %v329 = vmul.f32 %v256, %v322
  %v330 = vmul.f32 %v256, %v326
  %v331 = vmul.f32 %v260, %v322
  %v332 = vmul.f32 %v260, %v326
  %v333 = vmul.f32 %v264, %v322
  %v334 = vmul.f32 %v264, %v326
  %v335 = vmul.f32 %v268, %v322
  %v336 = vmul.f32 %v268, %v326
  %v337 = vmul.f32 %v272, %v322
  %v338 = vmul.f32 %v272, %v326
  %v339 = vmul.f32 %v276, %v322
  %v340 = vmul.f32 %v276, %v326
  %v341 = vmul.f32 %v280, %v322
  %v342 = vmul.f32 %v280, %v326
  %v343 = vmul.f32 %v284, %v322
  %v344 = vmul.f32 %v284, %v326
  %v345 = vmul.f32 %v288, %v322
  %v346 = vmul.f32 %v288, %v326
  %v347 = vmul.f32 %v292, %v322
  %v348 = vmul.f32 %v292, %v326
  %v349 = vmul.f32 %v296, %v322
  %v350 = vmul.f32 %v296, %v326
  %v351 = vmul.f32 %v300, %v322
  %v352 = vmul.f32 %v300, %v326
  %v353 = vmul.f32 %v304, %v322
  %v354 = vmul.f32 %v304, %v326
  %v355 = vmul.f32 %v308, %v322
  %v356 = vmul.f32 %v308, %v326
  %v357 = vmul.f32 %v312, %v322
  %v358 = vmul.f32 %v312, %v326
  %v359 = vmul.f32 %v316, %v322
  %v360 = vmul.f32 %v316, %v326
  %v361 = vadd.f32 %v220, %v329
  %v362 = vadd.f32 %v221, %v330
  %v363 = vadd.f32 %v222, %v331
  %v364 = vadd.f32 %v223, %v332
  %v365 = vadd.f32 %v224, %v333
  %v366 = vadd.f32 %v225, %v334
  %v367 = vadd.f32 %v226, %v335
  %v368 = vadd.f32 %v227, %v336
  %v369 = vadd.f32 %v228, %v337
  %v370 = vadd.f32 %v229, %v338
  %v371 = vadd.f32 %v230, %v339
  %v372 = vadd.f32 %v231, %v340
  %v373 = vadd.f32 %v232, %v341
  %v374 = vadd.f32 %v233, %v342
  %v375 = vadd.f32 %v234, %v343
  %v376 = vadd.f32 %v235, %v344
  %v377 = vadd.f32 %v236, %v345
  %v378 = vadd.f32 %v237, %v346
  %v379 = vadd.f32 %v238, %v347
  %v380 = vadd.f32 %v239, %v348
  %v381 = vadd.f32 %v240, %v349
  %v382 = vadd.f32 %v241, %v350
  %v383 = vadd.f32 %v242, %v351
  %v384 = vadd.f32 %v243, %v352
  %v385 = vadd.f32 %v244, %v353
  %v386 = vadd.f32 %v245, %v354
  %v387 = vadd.f32 %v246, %v355
  %v388 = vadd.f32 %v247, %v356
  %v389 = vadd.f32 %v248, %v357
  %v390 = vadd.f32 %v249, %v358
  %v391 = vadd.f32 %v250, %v359
  %v392 = vadd.f32 %v251, %v360
  %v393 = vmax.f32 %v361, 0.0
  %v394 = vmax.f32 %v362, 0.0
  %v395 = vmax.f32 %v363, 0.0
  %v396 = vmax.f32 %v364, 0.0
  %v397 = vmax.f32 %v365, 0.0
  %v398 = vmax.f32 %v366, 0.0
  %v399 = vmax.f32 %v367, 0.0
  %v400 = vmax.f32 %v368, 0.0
  %v401 = vmax.f32 %v369, 0.0
  %v402 = vmax.f32 %v370, 0.0
  %v403 = vmax.f32 %v371, 0.0
  %v404 = vmax.f32 %v372, 0.0
  %v405 = vmax.f32 %v373, 0.0
  %v406 = vmax.f32 %v374, 0.0
  %v407 = vmax.f32 %v375, 0.0
  %v408 = vmax.f32 %v376, 0.0
  %v409 = vmax.f32 %v377, 0.0
  %v410 = vmax.f32 %v378, 0.0
  %v411 = vmax.f32 %v379, 0.0
  %v412 = vmax.f32 %v380, 0.0
  %v413 = vmax.f32 %v381, 0.0
  %v414 = vmax.f32 %v382, 0.0
  %v415 = vmax.f32 %v383, 0.0
  %v416 = vmax.f32 %v384, 0.0
  %v417 = vmax.f32 %v385, 0.0
  %v418 = vmax.f32 %v386, 0.0
  %v419 = vmax.f32 %v387, 0.0
  %v420 = vmax.f32 %v388, 0.0
  %v421 = vmax.f32 %v389, 0.0
  %v422 = vmax.f32 %v390, 0.0
  %v423 = vmax.f32 %v391, 0.0
  %v424 = vmax.f32 %v392, 0.0
  %425 = vset.pattern.permute.xlu0 3
  %426 = vperm.xlu0 %425, %v15
  %v427 = vpop.permute.xlu0 %426
  %429 = vset.pattern.permute.xlu0 3
  %430 = vperm.xlu0 %429, %v16
  %v431 = vpop.permute.xlu0 %430
  %433 = vset.pattern.permute.xlu0 3
  %434 = vperm.xlu0 %433, %v17
  %v435 = vpop.permute.xlu0 %434
  %437 = vset.pattern.permute.xlu0 3
  %438 = vperm.xlu0 %437, %v18
  %v439 = vpop.permute.xlu0 %438
  %441 = vset.pattern.permute.xlu0 3
  %442 = vperm.xlu0 %441, %v19
  %v443 = vpop.permute.xlu0 %442
  %445 = vset.pattern.permute.xlu0 3
  %446 = vperm.xlu0 %445, %v20
  %v447 = vpop.permute.xlu0 %446
  %449 = vset.pattern.permute.xlu0 3
  %450 = vperm.xlu0 %449, %v21
  %v451 = vpop.permute.xlu0 %450
  %453 = vset.pattern.permute.xlu0 3
  %454 = vperm.xlu0 %453, %v22
  %v455 = vpop.permute.xlu0 %454
  %457 = vset.pattern.permute.xlu0 3
  %458 = vperm.xlu0 %457, %v23
  %v459 = vpop.permute.xlu0 %458
  %461 = vset.pattern.permute.xlu0 3
  %462 = vperm.xlu0 %461, %v24
  %v463 = vpop.permute.xlu0 %462
  %465 = vset.pattern.permute.xlu0 3
  %466 = vperm.xlu0 %465, %v25
  %v467 = vpop.permute.xlu0 %466
  %469 = vset.pattern.permute.xlu0 3
  %470 = vperm.xlu0 %469, %v26
  %v471 = vpop.permute.xlu0 %470
  %473 = vset.pattern.permute.xlu0 3
  %474 = vperm.xlu0 %473, %v27
  %v475 = vpop.permute.xlu0 %474
  %477 = vset.pattern.permute.xlu0 3
  %478 = vperm.xlu0 %477, %v28
  %v479 = vpop.permute.xlu0 %478
  %481 = vset.pattern.permute.xlu0 3
  %482 = vperm.xlu0 %481, %v29
  %v483 = vpop.permute.xlu0 %482
  %485 = vset.pattern.permute.xlu0 3
  %486 = vperm.xlu0 %485, %v30
  %v487 = vpop.permute.xlu0 %486
  %v489 = vmul.f32 %v393, %v427
  %v490 = vmul.f32 %v394, %v427
  %v491 = vmul.f32 %v395, %v431
  %v492 = vmul.f32 %v396, %v431
  %v493 = vmul.f32 %v397, %v435
  %v494 = vmul.f32 %v398, %v435
  %v495 = vmul.f32 %v399, %v439
  %v496 = vmul.f32 %v400, %v439
  %v497 = vmul.f32 %v401, %v443
  %v498 = vmul.f32 %v402, %v443
  %v499 = vmul.f32 %v403, %v447
  %v500 = vmul.f32 %v404, %v447
  %v501 = vmul.f32 %v405, %v451
  %v502 = vmul.f32 %v406, %v451
  %v503 = vmul.f32 %v407, %v455
  %v504 = vmul.f32 %v408, %v455
  %v505 = vmul.f32 %v409, %v459
  %v506 = vmul.f32 %v410, %v459
  %v507 = vmul.f32 %v411, %v463
  %v508 = vmul.f32 %v412, %v463
  %v509 = vmul.f32 %v413, %v467
  %v510 = vmul.f32 %v414, %v467
  %v511 = vmul.f32 %v415, %v471
  %v512 = vmul.f32 %v416, %v471
  %v513 = vmul.f32 %v417, %v475
  %v514 = vmul.f32 %v418, %v475
  %v515 = vmul.f32 %v419, %v479
  %v516 = vmul.f32 %v420, %v479
  %v517 = vmul.f32 %v421, %v483
  %v518 = vmul.f32 %v422, %v483
  %v519 = vmul.f32 %v423, %v487
  %v520 = vmul.f32 %v424, %v487
  %v521 = vadd.f32 %v489, %v491
  %v522 = vadd.f32 %v521, %v493
  %v523 = vadd.f32 %v522, %v495
  %v524 = vadd.f32 %v523, %v497
  %v525 = vadd.f32 %v524, %v499
  %v526 = vadd.f32 %v525, %v501
  %v527 = vadd.f32 %v526, %v503
  %v528 = vadd.f32 %v527, %v505
  %v529 = vadd.f32 %v528, %v507
  %v530 = vadd.f32 %v529, %v509
  %v531 = vadd.f32 %v530, %v511
  %v532 = vadd.f32 %v531, %v513
  %v533 = vadd.f32 %v532, %v515
  %v534 = vadd.f32 %v533, %v517
  %v535 = vadd.f32 %v534, %v519
  %v536 = vrot.slane %v535, 4
  %v537 = vadd.f32 %v535, %v536
  %v538 = vrot.slane %v537, 2
  %v539 = vadd.f32 %v537, %v538
  %v540 = vrot.slane %v539, 1
  %v541 = vadd.f32 %v539, %v540
  %v542 = vadd.f32 %v490, %v492
  %v543 = vadd.f32 %v542, %v494
  %v544 = vadd.f32 %v543, %v496
  %v545 = vadd.f32 %v544, %v498
  %v546 = vadd.f32 %v545, %v500
  %v547 = vadd.f32 %v546, %v502
  %v548 = vadd.f32 %v547, %v504
  %v549 = vadd.f32 %v548, %v506
  %v550 = vadd.f32 %v549, %v508
  %v551 = vadd.f32 %v550, %v510
  %v552 = vadd.f32 %v551, %v512
  %v553 = vadd.f32 %v552, %v514
  %v554 = vadd.f32 %v553, %v516
  %v555 = vadd.f32 %v554, %v518
  %v556 = vadd.f32 %v555, %v520
  %v557 = vrot.slane %v556, 4
  %v558 = vadd.f32 %v556, %v557
  %v559 = vrot.slane %v558, 2
  %v560 = vadd.f32 %v558, %v559
  %v561 = vrot.slane %v560, 1
  %v562 = vadd.f32 %v560, %v561
  %v563 = vstv %s31
  %v564 = vadd.f32 %v541, %v563
  %v565 = vadd.f32 %v562, %v563
  %v568 = vcombine.low %v564, %v565
  %v570 = vunpack.c.l.s4 1966171168
  %v571 = vunpack.c.0.s8 %v570
  %v572 = vlaneseq
  %v573 = vshrl.u32 %v572, 7
  %v574 = vsub.s32 %v571, %v573
  %v575 = vrot.slane %v568, %v574
  %v577 = vunpack.c.l.s4 1966171168
  %v578 = vunpack.c.0.s8 %v577
  %v579 = vlaneseq
  %v580 = vshrl.u32 %v579, 7
  %v581 = vsub.s32 %v578, %v580
  %v582 = vrot.slane %v575, %v581
  %v584 = vlaneseq
  %vm585 = vcmp.ge.s32.totalorder %v584, 0
  %vm586 = vcmp.lt.s32.totalorder %v584, 256
  %vm587 = vmand %vm585, %vm586
  %588 = vst.msk [vmem:[%s3] sm:$0x3] %vm587, %v582
  // Predicated region
  $region14: #{_critic_forward_impl.1} parent=0 // pred_check
    _
  $region15: #{_critic_forward_impl.1} parent=0 // pred_check_branch
    %590 = sbr.rel (0) target = $region17
  $region16: #{_critic_forward_impl.1} parent=0 // pred_region
    _
  $region17: #{_critic_forward_impl.1} parent=0 // pred_fallthru
    _
  // Predicated region
  $region18: #{_critic_forward_impl.1} parent=0 // pred_check
    _
  $region19: #{_critic_forward_impl.1} parent=0 // pred_check_branch
    %592 = sbr.rel (0) target = $region21
  $region20: #{_critic_forward_impl.1} parent=0 // pred_region
    _
  $region21: #{_critic_forward_impl.1} parent=0 // pred_fallthru
    _

</llo_original>
